<compile_context>
chip_gen: v7x
topology: tpu7x:2x2x1
jax: 0.10.0
libtpu: 0.0.40
codegen_flags: <defaults>
</compile_context>

<pallas_src>
import jax
import jax.numpy as jnp
from jax.experimental import pallas as pl
from jax.experimental.pallas import tpu as pltpu

EPS = 1e-5
NEG_SLOPE = 0.2
LANE = 128
SUBLANE = 8
VMEM_LIMIT = 32 * 1024 * 1024  # safe on v5e/v6e (128 MiB) and v7x (64 MiB)


def _round_up(x, m):
    return (x + m - 1) // m * m


# --------- Pass 1: conv-as-matmul (bf16 MXU) + per-tile BN partial stats ----
def matmul_stats_kernel(p_ref, w_ref, y_ref, stats_ref):
    # p_ref    : (TM, Kd)    bf16 im2col patch tile
    # w_ref    : (Kd, Pp)    bf16 reshaped conv weight (resident across tiles)
    # y_ref    : (TM, Pp)    f32 pre-BN conv output tile
    # stats_ref: (1, 8, Pp)  f32; row 0 = per-channel sum, row 1 = sum of sq.
    y = jnp.dot(p_ref[...], w_ref[...], preferred_element_type=jnp.float32)
    y_ref[...] = y
    s1 = jnp.sum(y, axis=0, keepdims=True)          # (1, Pp)
    s2 = jnp.sum(y * y, axis=0, keepdims=True)      # (1, Pp)
    row = jax.lax.broadcasted_iota(jnp.int32, (SUBLANE, y.shape[1]), 0)
    stats = jnp.where(row == 0, s1, jnp.where(row == 1, s2, 0.0))
    stats_ref[...] = stats[None]


# --------- Pass 2: fused BN affine + LeakyReLU(0.2) --------------------------
def bn_lrelu_kernel(y_ref, scale_ref, shift_ref, o_ref):
    z = y_ref[...] * scale_ref[...] + shift_ref[...]
    o_ref[...] = jnp.maximum(z, NEG_SLOPE * z).astype(o_ref.dtype)


def conv_block_forward(x_nchw, weight, bias, gamma, beta, *,
                       stride=2, padding=1, tm=256):
    """x_nchw: (N, Cin, H, W); weight: (P, Cin, K, K) (PyTorch layout)."""
    N, Cin, H, W = x_nchw.shape
    P, _, K, _ = weight.shape
    Ho = (H + 2 * padding - K) // stride + 1
    Wo = (W + 2 * padding - K) // stride + 1
    M = N * Ho * Wo
    Kdim = K * K * Cin

    # --- padded / tiled sizes (lane-dense, 128-aligned matmul dims) ---
    Pp = _round_up(P, LANE)
    Kd = _round_up(Kdim, LANE)
    tm = max(SUBLANE, min(_round_up(tm, SUBLANE), _round_up(M, SUBLANE)))
    Mp = _round_up(M, tm)
    grid_m = Mp // tm

    # --- glue: NHWC + im2col (pure gather / layout, no FLOPs) ---
    x = jnp.transpose(x_nchw, (0, 2, 3, 1))                      # NHWC
    xp = jnp.pad(x, ((0, 0), (padding, padding), (padding, padding), (0, 0)))
    cols = []
    for kh in range(K):
        for kw in range(K):
            cols.append(
                xp[:, kh:kh + stride * Ho:stride, kw:kw + stride * Wo:stride, :]
            )                                                    # (N, Ho, Wo, Cin)
    patches = jnp.concatenate(cols, axis=-1).reshape(M, Kdim)
    patches = jnp.pad(patches, ((0, Mp - M), (0, Kd - Kdim))).astype(jnp.bfloat16)

    # weight -> (kh, kw, cin, planes) flattened to (Kd, Pp), matching patch order
    w2d = jnp.transpose(weight, (2, 3, 1, 0)).reshape(Kdim, P)
    w2d = jnp.pad(w2d, ((0, Kd - Kdim), (0, Pp - P))).astype(jnp.bfloat16)

    # Conv bias is mathematically cancelled by the train-mode BN mean subtraction.
    del bias

    # --- Pass 1: tiled matmul + per-tile partial BN stats ---
    flops1 = 2 * Mp * Kd * Pp
    bytes1 = (Mp * Kd * 2 + Kd * Pp * 2 + Mp * Pp * 4 + grid_m * SUBLANE * Pp * 4)
    y_full, stats = pl.pallas_call(
        matmul_stats_kernel,
        out_shape=(
            jax.ShapeDtypeStruct((Mp, Pp), jnp.float32),
            jax.ShapeDtypeStruct((grid_m, SUBLANE, Pp), jnp.float32),
        ),
        grid=(grid_m,),
        in_specs=[
            pl.BlockSpec((tm, Kd), lambda i: (i, 0)),      # streamed patch tiles
            pl.BlockSpec((Kd, Pp), lambda i: (0, 0)),      # weight stays resident
        ],
        out_specs=(
            pl.BlockSpec((tm, Pp), lambda i: (i, 0)),
            pl.BlockSpec((1, SUBLANE, Pp), lambda i: (i, 0, 0)),
        ),
        compiler_params=pltpu.CompilerParams(
            dimension_semantics=("parallel",),
            vmem_limit_bytes=VMEM_LIMIT,
        ),
        cost_estimate=pl.CostEstimate(
            flops=flops1, transcendentals=0, bytes_accessed=bytes1),
    )(patches, w2d)

    # --- tiny per-channel glue: fold BN into a single scale/shift FMA ---
    # Padded M rows and padded P columns contribute exact zeros to the sums,
    # so dividing by the true M keeps statistics correct.
    ssum = jnp.sum(stats[:, 0, :], axis=0)                       # (Pp,)
    ssq = jnp.sum(stats[:, 1, :], axis=0)                        # (Pp,)
    mean = ssum / M
    var = jnp.maximum(ssq / M - mean * mean, 0.0)
    gamma_p = jnp.pad(gamma.astype(jnp.float32), (0, Pp - P))
    beta_p = jnp.pad(beta.astype(jnp.float32), (0, Pp - P))
    scale = gamma_p * jax.lax.rsqrt(var + EPS)
    shift = beta_p - mean * scale
    scale2d = scale.reshape(1, Pp)
    shift2d = shift.reshape(1, Pp)

    # --- Pass 2: normalize + leaky_relu, tiled over M ---
    out2d = pl.pallas_call(
        bn_lrelu_kernel,
        out_shape=jax.ShapeDtypeStruct((Mp, Pp), jnp.float32),
        grid=(grid_m,),
        in_specs=[
            pl.BlockSpec((tm, Pp), lambda i: (i, 0)),
            pl.BlockSpec((1, Pp), lambda i: (0, 0)),
            pl.BlockSpec((1, Pp), lambda i: (0, 0)),
        ],
        out_specs=pl.BlockSpec((tm, Pp), lambda i: (i, 0)),
        compiler_params=pltpu.CompilerParams(
            dimension_semantics=("parallel",),
            vmem_limit_bytes=VMEM_LIMIT,
        ),
        cost_estimate=pl.CostEstimate(
            flops=4 * Mp * Pp, transcendentals=0,
            bytes_accessed=2 * Mp * Pp * 4),
    )(y_full, scale2d, shift2d)

    # slice off padding, back to NCHW
    out = out2d[:M, :P].reshape(N, Ho, Wo, P)
    return jnp.transpose(out, (0, 3, 1, 2))


def reference_forward(x_nchw, weight, bias, gamma, beta, *, stride=2, padding=1):
    """Pure-JAX reference: bf16-input conv (f32 accum) + train-mode BN + leaky relu."""
    y = jax.lax.conv_general_dilated(
        x_nchw.astype(jnp.bfloat16), weight.astype(jnp.bfloat16),
        window_strides=(stride, stride),
        padding=[(padding, padding), (padding, padding)],
        dimension_numbers=("NCHW", "OIHW", "NCHW"),
        preferred_element_type=jnp.float32,
    ) + bias.reshape(1, -1, 1, 1)
    mean = jnp.mean(y, axis=(0, 2, 3), keepdims=True)
    var = jnp.mean((y - mean) ** 2, axis=(0, 2, 3), keepdims=True)
    yh = (y - mean) * jax.lax.rsqrt(var + EPS)
    z = yh * gamma.reshape(1, -1, 1, 1) + beta.reshape(1, -1, 1, 1)
    return jnp.where(z >= 0, z, NEG_SLOPE * z)


if __name__ == "__main__":
    # ConvBlock(inplanes=4, planes=8, kernel_size=4, stride=2, padding=1)
    N, Cin, H, W = 2, 4, 16, 16
    P, K, stride, padding = 8, 4, 2, 1

    key = jax.random.PRNGKey(0)
    kx, kw, kb = jax.random.split(key, 3)
    x = jax.random.normal(kx, (N, Cin, H, W), dtype=jnp.float32)

    # Deterministic parameter init (kaiming-uniform-like bounds, synthetic).
    fan_in = Cin * K * K
    bound = 1.0 / (fan_in ** 0.5)
    weight = jax.random.uniform(kw, (P, Cin, K, K), minval=-bound, maxval=bound,
                                dtype=jnp.float32)
    bias = jax.random.uniform(kb, (P,), minval=-bound, maxval=bound,
                              dtype=jnp.float32)
    gamma = jnp.ones((P,), jnp.float32)   # BatchNorm2d default init
    beta = jnp.zeros((P,), jnp.float32)

    # tm=64 -> M=128 is split into a 2-wide grid so the tiled path is exercised.
    out = conv_block_forward(x, weight, bias, gamma, beta,
                             stride=stride, padding=padding, tm=64)
    out = jax.block_until_ready(out)

    ref = reference_forward(x, weight, bias, gamma, beta,
                            stride=stride, padding=padding)
    assert out.shape == (N, P, H // 2, W // 2)
    assert jnp.allclose(out, ref, atol=2e-3, rtol=2e-3), (
        float(jnp.max(jnp.abs(out - ref))))

    print("KERNEL_OK")
</pallas_src>

<mosaic_0001>
module attributes {stable_mosaic.version = 11 : i64} {
  func.func @matmul_stats_kernel(%arg0: i32, %arg1: memref<64x128xbf16, #tpu.memory_space<vmem>>, %arg2: memref<128x128xbf16, #tpu.memory_space<vmem>>, %arg3: memref<64x128xf32, #tpu.memory_space<vmem>>, %arg4: memref<1x8x128xf32, #tpu.memory_space<vmem>>) attributes {dimension_semantics = [#tpu.dimension_semantics<parallel>], iteration_bounds = array<i64: 2>, scalar_prefetch = 0 : i64, scratch_operands = 0 : i64, tpu.core_type = #tpu.core_type<tc>, window_params = [{transform_indices = @transform_0, window_bounds = array<i64: 64, 128>}, {pipeline_mode = #tpu.pipeline_mode<synchronous>, transform_indices = @transform_1, window_bounds = array<i64: 128, 128>}, {transform_indices = @transform_2, window_bounds = array<i64: 64, 128>}, {transform_indices = @transform_3, window_bounds = array<i64: 1, 8, 128>}]} {
    %c0 = arith.constant 0 : index
    %c0_0 = arith.constant 0 : index
    %0 = vector.load %arg1[%c0, %c0_0] : memref<64x128xbf16, #tpu.memory_space<vmem>>, vector<64x128xbf16>
    %c0_1 = arith.constant 0 : index
    %c0_2 = arith.constant 0 : index
    %1 = vector.load %arg2[%c0_1, %c0_2] : memref<128x128xbf16, #tpu.memory_space<vmem>>, vector<128x128xbf16>
    %cst = arith.constant dense<0.000000e+00> : vector<64x128xf32>
    %2 = tpu.matmul %0, %1, %cst {dimension_numbers = #tpu.dot_dimension_numbers<[1], [0], [0], [1], [0, 0, 1, 1], [], []>} : vector<64x128xbf16>, vector<128x128xbf16>, vector<64x128xf32> -> vector<64x128xf32>
    %c0_3 = arith.constant 0 : index
    %c0_4 = arith.constant 0 : index
    %3 = vector.load %arg3[%c0_3, %c0_4] : memref<64x128xf32, #tpu.memory_space<vmem>>, vector<64x128xf32>
    tpu.vector_store %arg3[%c0_3, %c0_4], %2 {strides = array<i32>} : memref<64x128xf32, #tpu.memory_space<vmem>>, vector<64x128xf32>,
    %cst_5 = arith.constant dense<0.000000e+00> : vector<128xf32>
    %4 = vector.multi_reduction <add>, %2, %cst_5 [0] : vector<64x128xf32> to vector<128xf32>
    %5 = vector.shape_cast %4 : vector<128xf32> to vector<1x128xf32>
    %6 = arith.mulf %2, %2 : vector<64x128xf32>
    %cst_6 = arith.constant dense<0.000000e+00> : vector<128xf32>
    %7 = vector.multi_reduction <add>, %6, %cst_6 [0] : vector<64x128xf32> to vector<128xf32>
    %8 = vector.shape_cast %7 : vector<128xf32> to vector<1x128xf32>
    %9 = tpu.iota {dimensions = array<i32: 0>} : vector<8x128xi32>
    %c0_i32 = arith.constant 0 : i32
    %10 = vector.broadcast %c0_i32 : i32 to vector<8x128xi32>
    %11 = arith.cmpi eq, %9, %10 : vector<8x128xi32>
    %c1_i32 = arith.constant 1 : i32
    %12 = vector.broadcast %c1_i32 : i32 to vector<8x128xi32>
    %13 = arith.cmpi eq, %9, %12 : vector<8x128xi32>
    %cst_7 = arith.constant 0.000000e+00 : f32
    %14 = vector.shape_cast %8 : vector<1x128xf32> to vector<1x128xf32>
    %15 = vector.broadcast %14 : vector<1x128xf32> to vector<8x128xf32>
    %16 = vector.broadcast %cst_7 : f32 to vector<8x128xf32>
    %17 = arith.select %13, %15, %16 : vector<8x128xi1>, vector<8x128xf32>
    %18 = vector.shape_cast %5 : vector<1x128xf32> to vector<1x128xf32>
    %19 = vector.broadcast %18 : vector<1x128xf32> to vector<8x128xf32>
    %20 = arith.select %11, %19, %17 : vector<8x128xi1>, vector<8x128xf32>
    %21 = vector.shape_cast %20 : vector<8x128xf32> to vector<1x8x128xf32>
    %c0_8 = arith.constant 0 : index
    %c0_9 = arith.constant 0 : index
    %c0_10 = arith.constant 0 : index
    %22 = vector.load %arg4[%c0_8, %c0_9, %c0_10] : memref<1x8x128xf32, #tpu.memory_space<vmem>>, vector<1x8x128xf32>
    tpu.vector_store %arg4[%c0_8, %c0_9, %c0_10], %21 {strides = array<i32>} : memref<1x8x128xf32, #tpu.memory_space<vmem>>, vector<1x8x128xf32>,
    return
  }
  func.func @transform_0(%arg0: i32) -> (i32, i32) {
    %c0_i32 = arith.constant 0 : i32
    %c0_i32_0 = arith.constant 0 : i32
    return %arg0, %c0_i32 : i32, i32
  }
  func.func @transform_1(%arg0: i32) -> (i32, i32) {
    %c0_i32 = arith.constant 0 : i32
    %c0_i32_0 = arith.constant 0 : i32
    %c0_i32_1 = arith.constant 0 : i32
    return %c0_i32, %c0_i32_0 : i32, i32
  }
  func.func @transform_2(%arg0: i32) -> (i32, i32) {
    %c0_i32 = arith.constant 0 : i32
    %c0_i32_0 = arith.constant 0 : i32
    return %arg0, %c0_i32 : i32, i32
  }
  func.func @transform_3(%arg0: i32) -> (i32, i32, i32) {
    %c0_i32 = arith.constant 0 : i32
    %c0_i32_0 = arith.constant 0 : i32
    %c0_i32_1 = arith.constant 0 : i32
    return %arg0, %c0_i32, %c0_i32_0 : i32, i32, i32
  }
}

</mosaic_0001>

<llo_original>
// kernel: tpu_custom_call.1
$region0: #{tpu_custom_call.1}
  #allocation0 [shape = 'u32[]', space=smem, size = 0x4, offset = 0x4, fixed_abs, tag = 'smem constant byte address 0x4 - core index']
  #allocation1 [shape = 'u32[144,128]{1,0:T(1,128)}', space=vmem, size = 0x12000, scoped, tag = 'internal scratch']
  %s0 = inlined_call_operand.hbm [shape: bf16[128,128], index: 0, kind: input, shape index: {}]
  %s1 = inlined_call_operand.hbm [shape: bf16[128,128], index: 1, kind: input, shape index: {}]
  %s2 = inlined_call_operand.hbm [shape: f32[128,128], index: 2, kind: output, shape index: {0}]
  %s3 = inlined_call_operand.hbm [shape: f32[2,8,128], index: 3, kind: output, shape index: {1}]
  %4 = xla_tuple %s2, %s3
  %s5 = sld [smem:[#allocation0]]
  $region57: #{tpu_custom_call.1} parent=0
    _
  %s7 = ssub.s32 1, %s5
  %s8 = scalar_select 0, %s7, %s5
  $region1: #{tpu_custom_call.1} parent=0
    #allocation2 [shape = 'u8[32768]{0}', space=vmem, size = 0x8000, scoped, tag = 'input window, operand 0']
    #allocation3 [shape = 's32[2]{0}', space=sflag, size = 0x8, scoped, tag = 'scoped memory for tpu_custom_call.1']
    #allocation4 [shape = 's32[2]{0}', space=sflag, size = 0x8, scoped, tag = 'scoped memory for tpu_custom_call.1']
    #allocation5 [shape = 'u8[32768]{0}', space=vmem, size = 0x8000, scoped, tag = 'input window, operand 1, single buffered']
    #allocation6 [shape = 's32[1]{0}', space=sflag, size = 0x4, scoped, tag = 'scoped memory for tpu_custom_call.1']
    #allocation7 [shape = 'u8[65536]{0}', space=vmem, size = 0x10000, scoped, tag = 'output window, operand 0']
    #allocation8 [shape = 'u8[8192]{0}', space=vmem, size = 0x2000, scoped, tag = 'output window, operand 1']
    #allocation9 [shape = 's32[2]{0}', space=sflag, size = 0x8, scoped, tag = 'scoped memory for tpu_custom_call.1']
    %9 = vsyncpa [#allocation3], 0
    %s10 = scalar_lea.sflag [#allocation3], 1
    %11 = vsyncpa %s10, 0
    %12 = vsyncpa [#allocation6], 0
    %13 = vsyncpa [#allocation4], 0
    %s14 = scalar_lea.sflag [#allocation4], 1
    %15 = vsyncpa %s14, 0
    %16 = vsyncpa [#allocation9], 0
    %s17 = scalar_lea.sflag [#allocation9], 1
    %18 = vsyncpa %s17, 0
    loop: start=0, step=1, limit=4
    $region2: #{tpu_custom_call.1} parent=1 // loop_pre_header
      _
    $region3: #{tpu_custom_call.1} parent=1 // loop_header
      %s20 = sphi 0, %s24
      %p21 = scmp.ge.s32.totalorder %s20, 4
      %s30 = sphi 0, %s32
      %s33 = sphi 0, %s30
      %s34 = sphi 0, %s33
      %s50 = sphi 0, %s34
      %s54 = sphi 0, %s54
      %s56 = sphi 0, %s54
      %s57 = sphi 0, %s56
      %s71 = sphi 0, %s57
      %s77 = sphi 0, %s79
      %s80 = sphi 0, %s77
      %s81 = sphi 0, %s80
      %s97 = sphi 0, %s81
      %s103 = sphi 0, %s105
      %s106 = sphi 0, %s103
      %s107 = sphi 0, %s106
      %s123 = sphi 0, %s107
    $region4: #{tpu_custom_call.1} parent=1 // loop_header_branch
      %23 = sbr.rel (%p21) target = $region8
    $region5: #{tpu_custom_call.1} parent=1 // loop_body
      %s25 = ssub.s32 %s20, 1
      %s26 = ssub.s32 %s20, 2
      %s27 = sadd.s32 %s20, 1
      %s28 = ssub.s32 %s20, %s27
      %p29 = scmp.eq.s32.totalorder %s28, 0
      %s31 = sadd.s32 %s30, 1
      %s32 = scalar_select %p29, %s30, %s31
      %p35 = pneg %p29
      %p36 = scmp.eq.s32.totalorder %s20, 1
      %p37 = por %p35, %p36
      %p38 = scmp.ne.s32.totalorder %s30, %s33
      %p39 = scmp.eq.s32.totalorder %s20, 0
      %p40 = por %p38, %p39
      %p41 = scmp.ne.s32.totalorder %s30, %s33
      %p42 = scmp.eq.s32.totalorder %s25, 1
      %p43 = por %p41, %p42
      %p44 = scmp.ne.s32.totalorder %s33, %s34
      %p45 = scmp.eq.s32.totalorder %s25, 0
      %p46 = por %p44, %p45
      %p47 = scmp.ne.s32.totalorder %s33, %s34
      %p48 = scmp.eq.s32.totalorder %s26, 1
      %p49 = por %p47, %p48
      %p51 = scmp.ne.s32.totalorder %s34, %s50
      %p52 = scmp.eq.s32.totalorder %s26, 0
      %p53 = por %p51, %p52
      %s55 = sadd.s32 %s54, 1
      %p58 = scmp.eq.s32.totalorder %s20, 1
      %p59 = scmp.ne.s32.totalorder %s54, %s56
      %p60 = scmp.eq.s32.totalorder %s20, 0
      %p61 = por %p59, %p60
      %p62 = scmp.ne.s32.totalorder %s54, %s56
      %p63 = scmp.eq.s32.totalorder %s25, 1
      %p64 = por %p62, %p63
      %p65 = scmp.ne.s32.totalorder %s56, %s57
      %p66 = scmp.eq.s32.totalorder %s25, 0
      %p67 = por %p65, %p66
      %p68 = scmp.ne.s32.totalorder %s56, %s57
      %p69 = scmp.eq.s32.totalorder %s26, 1
      %p70 = por %p68, %p69
      %p72 = scmp.ne.s32.totalorder %s57, %s71
      %p73 = scmp.eq.s32.totalorder %s26, 0
      %p74 = por %p72, %p73
      %s75 = ssub.s32 %s20, %s27
      %p76 = scmp.eq.s32.totalorder %s75, 0
      %s78 = sadd.s32 %s77, 1
      %s79 = scalar_select %p76, %s77, %s78
      %p82 = pneg %p76
      %p83 = scmp.eq.s32.totalorder %s20, 1
      %p84 = por %p82, %p83
      %p85 = scmp.ne.s32.totalorder %s77, %s80
      %p86 = scmp.eq.s32.totalorder %s20, 0
      %p87 = por %p85, %p86
      %p88 = scmp.ne.s32.totalorder %s77, %s80
      %p89 = scmp.eq.s32.totalorder %s25, 1
      %p90 = por %p88, %p89
      %p91 = scmp.ne.s32.totalorder %s80, %s81
      %p92 = scmp.eq.s32.totalorder %s25, 0
      %p93 = por %p91, %p92
      %p94 = scmp.ne.s32.totalorder %s80, %s81
      %p95 = scmp.eq.s32.totalorder %s26, 1
      %p96 = por %p94, %p95
      %p98 = scmp.ne.s32.totalorder %s81, %s97
      %p99 = scmp.eq.s32.totalorder %s26, 0
      %p100 = por %p98, %p99
      %s101 = ssub.s32 %s20, %s27
      %p102 = scmp.eq.s32.totalorder %s101, 0
      %s104 = sadd.s32 %s103, 1
      %s105 = scalar_select %p102, %s103, %s104
      %p108 = pneg %p102
      %p109 = scmp.eq.s32.totalorder %s20, 1
      %p110 = por %p108, %p109
      %p111 = scmp.ne.s32.totalorder %s103, %s106
      %p112 = scmp.eq.s32.totalorder %s20, 0
      %p113 = por %p111, %p112
      %p114 = scmp.ne.s32.totalorder %s103, %s106
      %p115 = scmp.eq.s32.totalorder %s25, 1
      %p116 = por %p114, %p115
      %p117 = scmp.ne.s32.totalorder %s106, %s107
      %p118 = scmp.eq.s32.totalorder %s25, 0
      %p119 = por %p117, %p118
      %p120 = scmp.ne.s32.totalorder %s106, %s107
      %p121 = scmp.eq.s32.totalorder %s26, 1
      %p122 = por %p120, %p121
      %p124 = scmp.ne.s32.totalorder %s107, %s123
      %p125 = scmp.eq.s32.totalorder %s26, 0
      %p126 = por %p124, %p125
      %p127 = scmp.le.s32.totalorder 1, %s20
      %p128 = scmp.lt.s32.totalorder %s20, 3
      %p129 = pnand %p127, %p128
      %p130 = pneg %p129
      // Predicated region
      $region9: #{tpu_custom_call.1} parent=5 // pred_check
        _
      $region10: #{tpu_custom_call.1} parent=5 // pred_check_branch
        %132 = sbr.rel (%p129) target = $region12
      $region11: #{tpu_custom_call.1} parent=5 // pred_region
        %s133 = ssub.s32 %s20, 1
        // Predicated region
        $region13: #{tpu_custom_call.1} parent=11 // pred_check
          %p134 = pneg %p67
        $region14: #{tpu_custom_call.1} parent=11 // pred_check_branch
          %136 = sbr.rel (%p134) target = $region16
        $region15: #{tpu_custom_call.1} parent=11 // pred_region
          %s138 = ssub.s32 1024, 1024
          %139 = vsyncadd [#allocation6], %s138
          %s140 = sshll.u32 [#allocation5], 4
          %s141 = int_to_ptr.vmem [resolvable:$true] %s140
          %146 = dma.hbm_to_vmem [thread:$0]  %s1, 1024, %s141, [#allocation6], 64, 64, 4
        $region16: #{tpu_custom_call.1} parent=11 // pred_fallthru
          _
      $region12: #{tpu_custom_call.1} parent=5 // pred_fallthru
        _
      %p147 = scmp.lt.s32.totalorder %s20, 2
      // Predicated region
      $region17: #{tpu_custom_call.1} parent=5 // pred_check
        %p148 = pneg %p147
      $region18: #{tpu_custom_call.1} parent=5 // pred_check_branch
        %150 = sbr.rel (%p148) target = $region20
      $region19: #{tpu_custom_call.1} parent=5 // pred_region
        // Predicated region
        $region21: #{tpu_custom_call.1} parent=19 // pred_check
          %p151 = pneg %p40
        $region22: #{tpu_custom_call.1} parent=19 // pred_check_branch
          %153 = sbr.rel (%p151) target = $region24
        $region23: #{tpu_custom_call.1} parent=19 // pred_region
          %s154 = sand.u32 %s30, 1
          %s155 = scalar_lea.sflag [#allocation3], %s154
          %s156 = sand.u32 %s30, 1
          %s157 = smul.addr %s156, 32
          %s158 = scalar_lea.vmem [#allocation2], %s157
          %s159 = smul.u32 8, %s20
          %s161 = ssub.s32 512, 512
          %162 = vsyncadd %s155, %s161
          %s163 = smul.addr %s159, 64
          %s164 = scalar_lea.hbm %s0, %s163
          %s165 = sshll.u32 %s158, 4
          %s166 = int_to_ptr.vmem [resolvable:$true] %s165
          %171 = dma.hbm_to_vmem [thread:$0]  %s164, 512, %s166, %s155, 64, 64, 4
        $region24: #{tpu_custom_call.1} parent=19 // pred_fallthru
          _
      $region20: #{tpu_custom_call.1} parent=5 // pred_fallthru
        _
      %p172 = scmp.le.s32.totalorder 1, %s20
      %p173 = scmp.lt.s32.totalorder %s20, 3
      %p174 = pnand %p172, %p173
      %p175 = pneg %p174
      // Predicated region
      $region25: #{tpu_custom_call.1} parent=5 // pred_check
        _
      $region26: #{tpu_custom_call.1} parent=5 // pred_check_branch
        %177 = sbr.rel (%p174) target = $region28
      $region27: #{tpu_custom_call.1} parent=5 // pred_region
        %s178 = ssub.s32 %s20, 1
        %s179 = sand.u32 %s33, 1
        %s180 = scalar_lea.sflag [#allocation3], %s179
        %s181 = sand.u32 %s33, 1
        %s182 = smul.addr %s181, 32
        %s183 = scalar_lea.vmem [#allocation2], %s182
        // Predicated region
        $region29: #{tpu_custom_call.1} parent=27 // pred_check
          %p184 = pneg %p46
        $region30: #{tpu_custom_call.1} parent=27 // pred_check_branch
          %186 = sbr.rel (%p184) target = $region32
        $region31: #{tpu_custom_call.1} parent=27 // pred_region
          %187 = dma.done %s180, 512
        $region32: #{tpu_custom_call.1} parent=27 // pred_fallthru
          _
        // Predicated region
        $region33: #{tpu_custom_call.1} parent=27 // pred_check
          %p188 = pneg %p67
        $region34: #{tpu_custom_call.1} parent=27 // pred_check_branch
          %190 = sbr.rel (%p188) target = $region36
        $region35: #{tpu_custom_call.1} parent=27 // pred_region
          %191 = dma.done [#allocation6], 1024
        $region36: #{tpu_custom_call.1} parent=27 // pred_fallthru
          _
        %s192 = sand.u32 %s33, 1
        %s193 = scalar_lea.sflag [#allocation3], %s192
        %s194 = sand.u32 %s33, 1
        %s195 = smul.addr %s194, 32
        %s196 = scalar_lea.vmem [#allocation2], %s195
        %p197 = pneg %p46
        %p198 = pneg %p43
        %p199 = pneg %p67
        %p200 = pneg %p64
        %p201 = pneg %p93
        %p202 = pneg %p90
        %s203 = sand.u32 %s80, 1
        %s204 = scalar_lea.sflag [#allocation4], %s203
        %s205 = sand.u32 %s80, 1
        %s206 = smul.addr %s205, 64
        %s207 = scalar_lea.vmem [#allocation7], %s206
        %p208 = pneg %p119
        %p209 = pneg %p116
        %s210 = sand.u32 %s106, 1
        %s211 = scalar_lea.sflag [#allocation9], %s210
        %s212 = sand.u32 %s106, 1
        %s213 = smul.addr %s212, 8
        %s214 = scalar_lea.vmem [#allocation8], %s213
        %s215 = smul.u32 8, %s25
        %s216 = smul.u32 8, %s25
        %v218 = vld [vmem:[%s183] sm:$0xf]
        %v219 = vld [vmem:[%s183 + $0x4] sm:$0xf]
        %v220 = vld [vmem:[%s183 + $0x8] sm:$0xf]
        %v221 = vld [vmem:[%s183 + $0xc] sm:$0xf]
        %v222 = vld [vmem:[%s183 + $0x10] sm:$0xf]
        %v223 = vld [vmem:[%s183 + $0x14] sm:$0xf]
        %v224 = vld [vmem:[%s183 + $0x18] sm:$0xf]
        %v225 = vld [vmem:[%s183 + $0x1c] sm:$0xf]
        %v226 = vld [vmem:[#allocation5] sm:$0xf]
        %v227 = vld [vmem:[#allocation5 + $0x4] sm:$0xf]
        %v228 = vld [vmem:[#allocation5 + $0x8] sm:$0xf]
        %v229 = vld [vmem:[#allocation5 + $0xc] sm:$0xf]
        %v230 = vld [vmem:[#allocation5 + $0x10] sm:$0xf]
        %v231 = vld [vmem:[#allocation5 + $0x14] sm:$0xf]
        %v232 = vld [vmem:[#allocation5 + $0x18] sm:$0xf]
        %v233 = vld [vmem:[#allocation5 + $0x1c] sm:$0xf]
        %v234 = vld [vmem:[#allocation5 + $0x20] sm:$0xf]
        %v235 = vld [vmem:[#allocation5 + $0x24] sm:$0xf]
        %v236 = vld [vmem:[#allocation5 + $0x28] sm:$0xf]
        %v237 = vld [vmem:[#allocation5 + $0x2c] sm:$0xf]
        %v238 = vld [vmem:[#allocation5 + $0x30] sm:$0xf]
        %v239 = vld [vmem:[#allocation5 + $0x34] sm:$0xf]
        %v240 = vld [vmem:[#allocation5 + $0x38] sm:$0xf]
        %v241 = vld [vmem:[#allocation5 + $0x3c] sm:$0xf]
        %v250 = vunpack.c.l.b16 %v218
        %v251 = vunpack.c.l.b16 %v219
        %v252 = vunpack.c.l.b16 %v220
        %v253 = vunpack.c.l.b16 %v221
        %v254 = vunpack.c.l.b16 %v222
        %v255 = vunpack.c.l.b16 %v223
        %v256 = vunpack.c.l.b16 %v224
        %v257 = vunpack.c.l.b16 %v225
        %v258 = vpack.c.b16 %v251, %v250
        %v259 = vpack.c.b16 %v253, %v252
        %v260 = vpack.c.b16 %v255, %v254
        %v261 = vpack.c.b16 %v257, %v256
        %v282 = vunpack.c.l.b16 %v226
        %v283 = vunpack.c.l.b16 %v227
        %v284 = vunpack.c.l.b16 %v228
        %v285 = vunpack.c.l.b16 %v229
        %v286 = vunpack.c.l.b16 %v230
        %v287 = vunpack.c.l.b16 %v231
        %v288 = vunpack.c.l.b16 %v232
        %v289 = vunpack.c.l.b16 %v233
        %v290 = vunpack.c.l.b16 %v234
        %v291 = vunpack.c.l.b16 %v235
        %v292 = vunpack.c.l.b16 %v236
        %v293 = vunpack.c.l.b16 %v237
        %v294 = vunpack.c.l.b16 %v238
        %v295 = vunpack.c.l.b16 %v239
        %v296 = vunpack.c.l.b16 %v240
        %v297 = vunpack.c.l.b16 %v241
        %v298 = vpack.c.b16 %v283, %v282
        %v299 = vpack.c.b16 %v285, %v284
        %v300 = vpack.c.b16 %v287, %v286
        %v301 = vpack.c.b16 %v289, %v288
        %v302 = vpack.c.b16 %v291, %v290
        %v303 = vpack.c.b16 %v293, %v292
        %v304 = vpack.c.b16 %v295, %v294
        %v305 = vpack.c.b16 %v297, %v296
        %314 = vmatprep.subr.bf16.mxu0 0
        %315 = vmatpush1.bf16.msra.mxu0 %v298
        %316 = vmatprep.subr.bf16.mxu0 0
        %317 = vmatpush1.bf16.msra.mxu0 %v299
        %318 = vmatprep.subr.bf16.mxu0 0
        %319 = vmatpush1.bf16.msra.mxu0 %v300
        %320 = vmatprep.subr.bf16.mxu0 0
        %321 = vmatpush1.bf16.msra.mxu0 %v301
        %322 = vmatprep.subr.bf16.mxu0 0
        %323 = vmatpush1.bf16.msra.mxu0 %v302
        %324 = vmatprep.subr.bf16.mxu0 0
        %325 = vmatpush1.bf16.msra.mxu0 %v303
        %326 = vmatprep.subr.bf16.mxu0 0
        %327 = vmatpush1.bf16.msra.mxu0 %v304
        %328 = vmatprep.subr.bf16.mxu0 0
        %329 = vmatpush1.bf16.msra.mxu0 %v305
        %330 = vmatprep.subr.bf16.mxu0 0
        %331 = vmatpush1.bf16.msra.mxu0 0
        %332 = vmatprep.subr.bf16.mxu0 0
        %333 = vmatpush1.bf16.msra.mxu0 0
        %334 = vmatprep.subr.bf16.mxu0 0
        %335 = vmatpush1.bf16.msra.mxu0 0
        %336 = vmatprep.subr.bf16.mxu0 0
        %337 = vmatpush1.bf16.msra.mxu0 0
        %338 = vmatprep.subr.bf16.mxu0 0
        %339 = vmatpush1.bf16.msra.mxu0 0
        %340 = vmatprep.subr.bf16.mxu0 0
        %341 = vmatpush1.bf16.msra.mxu0 0
        %342 = vmatprep.subr.bf16.mxu0 0
        %343 = vmatpush1.bf16.msra.mxu0 0
        %344 = vmatprep.subr.bf16.mxu0 0
        %345 = vmatpush1.bf16.msra.mxu0 0
        %346 = vmatprep.mubr.bf16.mxu0 0
        %347 = vmatmul.mubr.bf16.gmra.mrb[0].mxu0 %v258
        %v348 = vpop.f32.mrb[0].mxu0
        %v349 = vadd.f32 0.0, %v348
        %v350 = vpop.f32.mrb[0].mxu0
        %v351 = vpop.f32.mrb[0].mxu0
        %v352 = vadd.f32 0.0, %v351
        %v353 = vpop.f32.mrb[0].mxu0
        %354 = vmatprep.mubr.bf16.mxu0 0
        %355 = vmatmul.mubr.bf16.gmra.mrb[0].mxu0 %v259
        %v356 = vpop.f32.mrb[0].mxu0
        %v357 = vadd.f32 0.0, %v356
        %v358 = vpop.f32.mrb[0].mxu0
        %v359 = vpop.f32.mrb[0].mxu0
        %v360 = vadd.f32 0.0, %v359
        %v361 = vpop.f32.mrb[0].mxu0
        %362 = vmatprep.mubr.bf16.mxu0 0
        %363 = vmatmul.mubr.bf16.gmra.mrb[0].mxu0 %v260
        %v364 = vpop.f32.mrb[0].mxu0
        %v365 = vadd.f32 0.0, %v364
        %v366 = vpop.f32.mrb[0].mxu0
        %v367 = vpop.f32.mrb[0].mxu0
        %v368 = vadd.f32 0.0, %v367
        %v369 = vpop.f32.mrb[0].mxu0
        %370 = vmatprep.mubr.bf16.mxu0 0
        %371 = vmatmul.mubr.bf16.gmra.mrb[0].mxu0 %v261
        %v372 = vpop.f32.mrb[0].mxu0
        %v373 = vadd.f32 0.0, %v372
        %v374 = vpop.f32.mrb[0].mxu0
        %v375 = vpop.f32.mrb[0].mxu0
        %v376 = vadd.f32 0.0, %v375
        %v377 = vpop.f32.mrb[0].mxu0
        %378 = vdwg.mxu0
        %379 = vst [vmem:[%s207] sm:$0xff] %v349
        %380 = vst [vmem:[%s207 + $0x8] sm:$0xff] %v352
        %381 = vst [vmem:[%s207 + $0x10] sm:$0xff] %v357
        %382 = vst [vmem:[%s207 + $0x18] sm:$0xff] %v360
        %383 = vst [vmem:[%s207 + $0x20] sm:$0xff] %v365
        %384 = vst [vmem:[%s207 + $0x28] sm:$0xff] %v368
        %385 = vst [vmem:[%s207 + $0x30] sm:$0xff] %v373
        %386 = vst [vmem:[%s207 + $0x38] sm:$0xff] %v376
        %v387 = vadd.f32 %v349, %v352
        %v388 = vadd.f32 %v387, %v357
        %v389 = vadd.f32 %v388, %v360
        %v390 = vadd.f32 %v389, %v365
        %v391 = vadd.f32 %v390, %v368
        %v392 = vadd.f32 %v391, %v373
        %v393 = vadd.f32 %v392, %v376
        %v394 = vrot.slane %v393, 4
        %v395 = vadd.f32 %v393, %v394
        %v396 = vrot.slane %v395, 2
        %v397 = vadd.f32 %v395, %v396
        %v398 = vrot.slane %v397, 1
        %v399 = vadd.f32 %v397, %v398
        %v400 = vmul.f32 %v349, %v349
        %v401 = vmul.f32 %v352, %v352
        %v402 = vmul.f32 %v357, %v357
        %v403 = vmul.f32 %v360, %v360
        %v404 = vmul.f32 %v365, %v365
        %v405 = vmul.f32 %v368, %v368
        %v406 = vmul.f32 %v373, %v373
        %v407 = vmul.f32 %v376, %v376
        %v408 = vadd.f32 %v400, %v401
        %v409 = vadd.f32 %v408, %v402
        %v410 = vadd.f32 %v409, %v403
        %v411 = vadd.f32 %v410, %v404
        %v412 = vadd.f32 %v411, %v405
        %v413 = vadd.f32 %v412, %v406
        %v414 = vadd.f32 %v413, %v407
        %v415 = vrot.slane %v414, 4
        %v416 = vadd.f32 %v414, %v415
        %v417 = vrot.slane %v416, 2
        %v418 = vadd.f32 %v416, %v417
        %v419 = vrot.slane %v418, 1
        %v420 = vadd.f32 %v418, %v419
        %v421 = vlaneseq
        %v422 = vshrl.u32 %v421, 7
        %vm423 = vcmp.eq.s32.totalorder %v422, 0
        %vm424 = vcmp.eq.s32.totalorder %v422, 1
        %v425 = vsel %vm424, %v420, 0.0
        %v426 = vsel %vm423, %v399, %v425
        %427 = vst [vmem:[%s214] sm:$0xff] %v426
        %s428 = sand.u32 %s80, 1
        %s429 = scalar_lea.sflag [#allocation4], %s428
        %s430 = sand.u32 %s80, 1
        %s431 = smul.addr %s430, 64
        %s432 = scalar_lea.vmem [#allocation7], %s431
        %s433 = sand.u32 %s106, 1
        %s434 = scalar_lea.sflag [#allocation9], %s433
        %s435 = sand.u32 %s106, 1
        %s436 = smul.addr %s435, 8
        %s437 = scalar_lea.vmem [#allocation8], %s436
        // Predicated region
        $region37: #{tpu_custom_call.1} parent=27 // pred_check
          %p438 = pneg %p90
        $region38: #{tpu_custom_call.1} parent=27 // pred_check_branch
          %440 = sbr.rel (%p438) target = $region40
        $region39: #{tpu_custom_call.1} parent=27 // pred_region
          %s441 = smul.u32 8, %s25
          %s443 = ssub.s32 1024, 1024
          %444 = vsyncadd %s429, %s443
          %s445 = smul.addr %s441, 128
          %s446 = scalar_lea.hbm %s2, %s445
          %s447 = sshll.u32 %s432, 4
          %s448 = int_to_ptr.vmem [resolvable:$true] %s447
          %453 = dma.vmem_to_hbm [thread:$0]  %s448, 1024, %s446, %s429, 128, 128, 8
        $region40: #{tpu_custom_call.1} parent=27 // pred_fallthru
          _
        // Predicated region
        $region41: #{tpu_custom_call.1} parent=27 // pred_check
          %p454 = pneg %p116
        $region42: #{tpu_custom_call.1} parent=27 // pred_check_branch
          %456 = sbr.rel (%p454) target = $region44
        $region43: #{tpu_custom_call.1} parent=27 // pred_region
          %s458 = ssub.s32 128, 128
          %459 = vsyncadd %s434, %s458
          %s460 = smul.addr %s25, 128
          %s461 = scalar_lea.hbm %s3, %s460
          %s463 = sshll.u32 %s437, 4
          %s464 = int_to_ptr.vmem [resolvable:$true] %s463
          %466 = dma.vmem_to_hbm [thread:$0]  %s464, 128, %s461, %s434
        $region44: #{tpu_custom_call.1} parent=27 // pred_fallthru
          _
      $region28: #{tpu_custom_call.1} parent=5 // pred_fallthru
        _
      %p467 = scmp.le.s32.totalorder 2, %s20
      // Predicated region
      $region45: #{tpu_custom_call.1} parent=5 // pred_check
        %p468 = pneg %p467
      $region46: #{tpu_custom_call.1} parent=5 // pred_check_branch
        %470 = sbr.rel (%p468) target = $region48
      $region47: #{tpu_custom_call.1} parent=5 // pred_region
        %s471 = ssub.s32 %s20, 2
        // Predicated region
        $region49: #{tpu_custom_call.1} parent=47 // pred_check
          %p472 = pneg %p96
        $region50: #{tpu_custom_call.1} parent=47 // pred_check_branch
          %474 = sbr.rel (%p472) target = $region52
        $region51: #{tpu_custom_call.1} parent=47 // pred_region
          %s475 = sand.u32 %s81, 1
          %s476 = scalar_lea.sflag [#allocation4], %s475
          %s477 = sand.u32 %s81, 1
          %s478 = smul.addr %s477, 64
          %s479 = scalar_lea.vmem [#allocation7], %s478
          %480 = dma.done %s476, 1024
        $region52: #{tpu_custom_call.1} parent=47 // pred_fallthru
          _
        // Predicated region
        $region53: #{tpu_custom_call.1} parent=47 // pred_check
          %p481 = pneg %p122
        $region54: #{tpu_custom_call.1} parent=47 // pred_check_branch
          %483 = sbr.rel (%p481) target = $region56
        $region55: #{tpu_custom_call.1} parent=47 // pred_region
          %s484 = sand.u32 %s107, 1
          %s485 = scalar_lea.sflag [#allocation9], %s484
          %s486 = sand.u32 %s107, 1
          %s487 = smul.addr %s486, 8
          %s488 = scalar_lea.vmem [#allocation8], %s487
          %489 = dma.done %s485, 128
        $region56: #{tpu_custom_call.1} parent=47 // pred_fallthru
          _
      $region48: #{tpu_custom_call.1} parent=5 // pred_fallthru
        _
    $region6: #{tpu_custom_call.1} parent=1 // loop_footer
      %s24 = sadd.s32 1, %s20
    $region7: #{tpu_custom_call.1} parent=1 // loop_footer_branch
      %19 = sbr.rel target = $region3
    $region8: #{tpu_custom_call.1} parent=1 // loop_exit
      _
    %490 = vsyncpa [#allocation3], 1
    %s491 = scalar_lea.sflag [#allocation3], 1
    %492 = vsyncpa %s491, 1
    %493 = vsyncpa [#allocation6], 1
    %494 = vsyncpa [#allocation4], 1
    %s495 = scalar_lea.sflag [#allocation4], 1
    %496 = vsyncpa %s495, 1
    %497 = vsyncpa [#allocation9], 1
    %s498 = scalar_lea.sflag [#allocation9], 1
    %499 = vsyncpa %s498, 1

</llo_original>
